<compile_context>
chip_gen: v6e
topology: v6e:2x2x1
jax: 0.10.0
libtpu: 0.0.40
codegen_flags: <defaults>
</compile_context>

<pallas_src>
import functools

import jax
import jax.numpy as jnp
from jax.experimental import pallas as pl
from jax.experimental.pallas import tpu as pltpu

EPSILON = 1e-6
ALPHA = 1.0
LANE = 128
SUBLANE = 8
CHUNK_ROWS = 256        # (256, 128) f32 chunk = 128 KiB live per quantity.
MAX_TILE_ROWS = 4096    # (4096, 128) f32 block = 2 MiB; 2 in x 2 bufs = 8 MiB.
NUM_SUMS = 5            # sum(y), sum(yp), sum(y*yp), sum(y*y), sum(yp*yp)
VMEM_LIMIT_BYTES = 32 * 1024 * 1024   # explicit: > v5e's 16 MiB scoped default


def _round_up(x, m):
    return (x + m - 1) // m * m


def _num_tensorcores():
    """Best-effort TensorCore count (v7x has 2 per chip, v5e/v6e have 1)."""
    # TODO(synk): if TpuInfo exposes no core-count field on this jax version we
    # fall back to 1, which is correct but leaves half of v7x's bandwidth idle.
    try:
        info = pltpu.get_tpu_info()
    except Exception:
        return 1
    for name in ("num_cores", "core_count", "num_tensorcores",
                 "tensor_core_count", "cores_per_chip"):
        v = getattr(info, name, None)
        if isinstance(v, int) and v >= 1:
            return v
    return 1


def _ncc_sums_kernel(y_ref, yp_ref, o_ref, *, rows_total, tile_rows,
                     chunk_rows, ragged):
    p = pl.program_id(0)          # TensorCore slice (parallel axis)
    s = pl.program_id(1)          # reduction step within the slice
    steps = pl.num_programs(1)

    @pl.when(s == 0)
    def _():
        o_ref[...] = jnp.zeros_like(o_ref)

    row0 = (p * steps + s) * tile_rows
    n_chunks = tile_rows // chunk_rows
    groups = chunk_rows // SUBLANE

    def fold(v):
        # (chunk_rows, 128) -> (8, 128): layout-preserving sublane split,
        # pure VPU vreg adds (no XLU, no scalar RMW chain).
        return jnp.sum(v.reshape(groups, SUBLANE, LANE), axis=0)

    def tile_sums(masked):
        def chunk_body(c, carry):
            r = pl.multiple_of(c * chunk_rows, chunk_rows)
            y = y_ref[pl.ds(r, chunk_rows), :].astype(jnp.float32)
            yp = yp_ref[pl.ds(r, chunk_rows), :].astype(jnp.float32)
            if masked:
                ridx = (jax.lax.broadcasted_iota(
                    jnp.int32, (chunk_rows, LANE), 0) + row0 + r)
                valid = ridx < rows_total
                y = jnp.where(valid, y, 0.0)
                yp = jnp.where(valid, yp, 0.0)
            a_y, a_yp, a_yyp, a_yy, a_ypyp = carry
            return (a_y + fold(y),
                    a_yp + fold(yp),
                    a_yyp + fold(y * yp),
                    a_yy + fold(y * y),
                    a_ypyp + fold(yp * yp))

        init = tuple(jnp.zeros((SUBLANE, LANE), jnp.float32)
                     for _ in range(NUM_SUMS))
        # unroll=True: short fixed trip-count, keeps the 5 accumulators in
        # vregs and gives the LLO scheduler full visibility.
        return jax.lax.fori_loop(0, n_chunks, chunk_body, init, unroll=True)

    def write(sums):
        for i, v in enumerate(sums):
            o_ref[0, i, :, :] += v

    if ragged:
        needs_mask = row0 + tile_rows > rows_total

        @pl.when(row0 + tile_rows <= rows_total)
        def _():  # unmasked fast path: every interior tile
            write(tile_sums(masked=False))

        @pl.when(needs_mask)
        def _():  # only the final partial tile and clamped dummy steps
            write(tile_sums(masked=True))
    else:
        write(tile_sums(masked=False))


def _ncc_raw_sums(y2, yp2, rows):
    """Run the streaming kernel over a (rows, 128) slab; return the 5 sums."""
    rows_p8 = _round_up(rows, SUBLANE)
    if rows_p8 <= CHUNK_ROWS:
        tile_rows = rows_p8
        chunk_rows = tile_rows
    else:
        tile_rows = min(MAX_TILE_ROWS, _round_up(rows, CHUNK_ROWS))
        chunk_rows = CHUNK_ROWS

    row_blocks = pl.cdiv(rows, tile_rows)
    num_slices = max(1, min(_num_tensorcores(), row_blocks))
    steps = pl.cdiv(row_blocks, num_slices)
    max_block = row_blocks - 1
    # Masked path only traced/compiled if some tile can straddle the end.
    ragged = (rows % tile_rows != 0) or (num_slices * steps != row_blocks)

    def in_map(p, s):
        # Clamp dummy trailing steps onto the last valid block; their
        # contribution is masked to zero inside the kernel.
        return (jnp.minimum(p * steps + s, max_block), 0)

    kernel = functools.partial(
        _ncc_sums_kernel, rows_total=rows, tile_rows=tile_rows,
        chunk_rows=chunk_rows, ragged=ragged)

    n_elems = rows * LANE
    itemsize = jnp.dtype(y2.dtype).itemsize
    cost = pl.CostEstimate(
        flops=8 * n_elems,
        transcendentals=0,
        bytes_accessed=2 * n_elems * itemsize
        + num_slices * NUM_SUMS * SUBLANE * LANE * 4,
    )

    partials = pl.pallas_call(
        kernel,
        out_shape=jax.ShapeDtypeStruct(
            (num_slices, NUM_SUMS, SUBLANE, LANE), jnp.float32),
        grid_spec=pltpu.PrefetchScalarGridSpec(
            num_scalar_prefetch=0,
            grid=(num_slices, steps),
            in_specs=[
                pl.BlockSpec((tile_rows, LANE), in_map),
                pl.BlockSpec((tile_rows, LANE), in_map),
            ],
            out_specs=pl.BlockSpec(
                (1, NUM_SUMS, SUBLANE, LANE), lambda p, s: (p, 0, 0, 0)),
        ),
        compiler_params=pltpu.CompilerParams(
            # "parallel" leading axis shards the slices across TensorCores on
            # multi-core chips; harmless size-1 loop on v5e/v6e.
            # TODO(synk): escalate to pltpu.CORE_PARALLEL if profiling shows
            # v7x codegen keeps both slices on one core.
            dimension_semantics=("parallel", "arbitrary"),
            vmem_limit_bytes=VMEM_LIMIT_BYTES,
        ),
        cost_estimate=cost,
    )(y2, yp2)

    # Tiny epilogue reduce over the (P, 5, 8, 128) partials.
    return jnp.sum(partials, axis=(0, 2, 3))


def ncc_loss(y, yp, alpha=ALPHA):
    assert y.shape == yp.shape, (y.shape, yp.shape)
    n = int(y.size)
    yf = y.reshape(-1)
    ypf = yp.reshape(-1)

    rows = n // LANE
    rem = n - rows * LANE

    sums = jnp.zeros((NUM_SUMS,), jnp.float32)

    if rows > 0:
        if rem:
            # TODO(synk): this slice copies the lane-aligned prefix through HBM
            # once; a manual-DMA (memory_space=pl.ANY) path could stream ragged
            # sizes zero-copy, but NCHW image losses are lane-aligned anyway.
            y_main = yf[: rows * LANE].reshape(rows, LANE)
            yp_main = ypf[: rows * LANE].reshape(rows, LANE)
        else:
            y_main = yf.reshape(rows, LANE)      # pure reshape, no copy
            yp_main = ypf.reshape(rows, LANE)
        sums = sums + _ncc_raw_sums(y_main, yp_main, rows)

    if rem:
        # <128-element ragged tail: O(1) epilogue instead of a padded rewrite.
        ty = yf[rows * LANE:].astype(jnp.float32)
        typ = ypf[rows * LANE:].astype(jnp.float32)
        sums = sums + jnp.stack([
            jnp.sum(ty), jnp.sum(typ), jnp.sum(ty * typ),
            jnp.sum(ty * ty), jnp.sum(typ * typ)])

    s_y, s_yp, s_yyp, s_yy, s_ypyp = (sums[i] for i in range(NUM_SUMS))
    n_f = jnp.float32(n)
    # sum((a - mean a)(b - mean b)) = sum(ab) - sum(a)sum(b)/N; variances are
    # clamped at 0 against single-pass f32 cancellation for high-mean inputs.
    num = s_yyp - s_y * s_yp / n_f
    var_y = jnp.maximum(s_yy - s_y * s_y / n_f, 0.0)
    var_yp = jnp.maximum(s_ypyp - s_yp * s_yp / n_f, 0.0)
    ncc = num / jnp.sqrt(var_y * var_yp + jnp.float32(EPSILON))
    return jnp.float32(alpha) * (1.0 - ncc)


def _ncc_loss_ref(y, yp, alpha=ALPHA):
    # Direct mirror of the PyTorch forward (two-pass, f32).
    y = y.astype(jnp.float32)
    yp = yp.astype(jnp.float32)
    y_ = y - jnp.mean(y)
    yp_ = yp - jnp.mean(yp)
    ncc = jnp.sum(y_ * yp_) / (jnp.sum(y_ ** 2) * jnp.sum(yp_ ** 2) + EPSILON) ** 0.5
    return alpha * (1.0 - ncc)


if __name__ == "__main__":
    key = jax.random.PRNGKey(0)
    k1, k2 = jax.random.split(key)

    # NCHW inputs (2, 4, 16, 16); yp correlated with y so NCC is non-trivial.
    y = jax.random.normal(k1, (2, 4, 16, 16), dtype=jnp.float32)
    yp = y + 0.5 * jax.random.normal(k2, (2, 4, 16, 16), dtype=jnp.float32)

    out = ncc_loss(y, yp)
    out = jax.block_until_ready(out)

    ref = _ncc_loss_ref(y, yp)
    assert jnp.allclose(out, ref, rtol=1e-4, atol=1e-5), (out, ref)

    print("KERNEL_OK")
</pallas_src>

<mosaic_0001>
module attributes {stable_mosaic.version = 11 : i64} {
  func.func @_ncc_sums_kernel(%arg0: i32, %arg1: i32, %arg2: memref<16x128xf32, #tpu.memory_space<vmem>>, %arg3: memref<16x128xf32, #tpu.memory_space<vmem>>, %arg4: memref<1x5x8x128xf32, #tpu.memory_space<vmem>>) attributes {dimension_semantics = [#tpu.dimension_semantics<parallel>, #tpu.dimension_semantics<arbitrary>], iteration_bounds = array<i64: 1, 1>, scalar_prefetch = 0 : i64, scratch_operands = 0 : i64, tpu.core_type = #tpu.core_type<tc>, window_params = [{transform_indices = @transform_0, window_bounds = array<i64: 16, 128>}, {transform_indices = @transform_1, window_bounds = array<i64: 16, 128>}, {transform_indices = @transform_2, window_bounds = array<i64: 1, 5, 8, 128>}]} {
    %c0_i32 = arith.constant 0 : i32
    %0 = arith.cmpi eq, %arg1, %c0_i32 : i32
    %1 = arith.extui %0 : i1 to i32
    %c0_i32_0 = arith.constant 0 : i32
    %2 = arith.cmpi ne, %1, %c0_i32_0 : i32
    scf.if %2 {
      %cst_48 = arith.constant 0.000000e+00 : f32
      %62 = vector.broadcast %cst_48 : f32 to vector<1x5x8x128xf32>
      %c0_49 = arith.constant 0 : index
      %c0_50 = arith.constant 0 : index
      %c0_51 = arith.constant 0 : index
      %c0_52 = arith.constant 0 : index
      %63 = vector.load %arg4[%c0_49, %c0_50, %c0_51, %c0_52] : memref<1x5x8x128xf32, #tpu.memory_space<vmem>>, vector<1x5x8x128xf32>
      tpu.vector_store %arg4[%c0_49, %c0_50, %c0_51, %c0_52], %62 {strides = array<i32>} : memref<1x5x8x128xf32, #tpu.memory_space<vmem>>, vector<1x5x8x128xf32>,
    } else {
    }
    %cst = arith.constant 0.000000e+00 : f32
    %3 = vector.broadcast %cst : f32 to vector<8x128xf32>
    %cst_1 = arith.constant 0.000000e+00 : f32
    %4 = vector.broadcast %cst_1 : f32 to vector<8x128xf32>
    %cst_2 = arith.constant 0.000000e+00 : f32
    %5 = vector.broadcast %cst_2 : f32 to vector<8x128xf32>
    %cst_3 = arith.constant 0.000000e+00 : f32
    %6 = vector.broadcast %cst_3 : f32 to vector<8x128xf32>
    %cst_4 = arith.constant 0.000000e+00 : f32
    %7 = vector.broadcast %cst_4 : f32 to vector<8x128xf32>
    %c0_i32_5 = arith.constant 0 : i32
    %c16_i32 = arith.constant 16 : i32
    %8 = arith.muli %c0_i32_5, %c16_i32 : i32
    %9 = tpu.assume_multiple %8, 16 : i32
    %10 = arith.index_cast %9 : i32 to index
    %c0 = arith.constant 0 : index
    %11 = vector.load %arg2[%10, %c0] : memref<16x128xf32, #tpu.memory_space<vmem>>, vector<16x128xf32>
    %12 = arith.index_cast %9 : i32 to index
    %c0_6 = arith.constant 0 : index
    %13 = vector.load %arg3[%12, %c0_6] : memref<16x128xf32, #tpu.memory_space<vmem>>, vector<16x128xf32>
    %14 = vector.shape_cast %11 : vector<16x128xf32> to vector<2x8x128xf32>
    %cst_7 = arith.constant dense<0.000000e+00> : vector<8x128xf32>
    %15 = vector.multi_reduction <add>, %14, %cst_7 [0] : vector<2x8x128xf32> to vector<8x128xf32>
    %16 = arith.addf %3, %15 : vector<8x128xf32>
    %17 = vector.shape_cast %13 : vector<16x128xf32> to vector<2x8x128xf32>
    %cst_8 = arith.constant dense<0.000000e+00> : vector<8x128xf32>
    %18 = vector.multi_reduction <add>, %17, %cst_8 [0] : vector<2x8x128xf32> to vector<8x128xf32>
    %19 = arith.addf %4, %18 : vector<8x128xf32>
    %20 = arith.mulf %11, %13 : vector<16x128xf32>
    %21 = vector.shape_cast %20 : vector<16x128xf32> to vector<2x8x128xf32>
    %cst_9 = arith.constant dense<0.000000e+00> : vector<8x128xf32>
    %22 = vector.multi_reduction <add>, %21, %cst_9 [0] : vector<2x8x128xf32> to vector<8x128xf32>
    %23 = arith.addf %5, %22 : vector<8x128xf32>
    %24 = arith.mulf %11, %11 : vector<16x128xf32>
    %25 = vector.shape_cast %24 : vector<16x128xf32> to vector<2x8x128xf32>
    %cst_10 = arith.constant dense<0.000000e+00> : vector<8x128xf32>
    %26 = vector.multi_reduction <add>, %25, %cst_10 [0] : vector<2x8x128xf32> to vector<8x128xf32>
    %27 = arith.addf %6, %26 : vector<8x128xf32>
    %28 = arith.mulf %13, %13 : vector<16x128xf32>
    %29 = vector.shape_cast %28 : vector<16x128xf32> to vector<2x8x128xf32>
    %cst_11 = arith.constant dense<0.000000e+00> : vector<8x128xf32>
    %30 = vector.multi_reduction <add>, %29, %cst_11 [0] : vector<2x8x128xf32> to vector<8x128xf32>
    %31 = arith.addf %7, %30 : vector<8x128xf32>
    %c1_i32 = arith.constant 1 : i32
    %c0_12 = arith.constant 0 : index
    %c0_13 = arith.constant 0 : index
    %c0_14 = arith.constant 0 : index
    %c0_15 = arith.constant 0 : index
    %32 = vector.load %arg4[%c0_12, %c0_13, %c0_14, %c0_15] : memref<1x5x8x128xf32, #tpu.memory_space<vmem>>, vector<1x1x8x128xf32>
    %33 = vector.shape_cast %32 : vector<1x1x8x128xf32> to vector<8x128xf32>
    %34 = arith.addf %33, %16 : vector<8x128xf32>
    %c0_16 = arith.constant 0 : index
    %c0_17 = arith.constant 0 : index
    %c0_18 = arith.constant 0 : index
    %c0_19 = arith.constant 0 : index
    %35 = vector.load %arg4[%c0_16, %c0_17, %c0_18, %c0_19] : memref<1x5x8x128xf32, #tpu.memory_space<vmem>>, vector<1x1x8x128xf32>
    %36 = vector.shape_cast %35 : vector<1x1x8x128xf32> to vector<8x128xf32>
    %37 = vector.shape_cast %34 : vector<8x128xf32> to vector<1x1x8x128xf32>
    tpu.vector_store %arg4[%c0_16, %c0_17, %c0_18, %c0_19], %37 {strides = array<i32>} : memref<1x5x8x128xf32, #tpu.memory_space<vmem>>, vector<1x1x8x128xf32>,
    %c0_20 = arith.constant 0 : index
    %c1 = arith.constant 1 : index
    %c0_21 = arith.constant 0 : index
    %c0_22 = arith.constant 0 : index
    %38 = vector.load %arg4[%c0_20, %c1, %c0_21, %c0_22] : memref<1x5x8x128xf32, #tpu.memory_space<vmem>>, vector<1x1x8x128xf32>
    %39 = vector.shape_cast %38 : vector<1x1x8x128xf32> to vector<8x128xf32>
    %40 = arith.addf %39, %19 : vector<8x128xf32>
    %c0_23 = arith.constant 0 : index
    %c1_24 = arith.constant 1 : index
    %c0_25 = arith.constant 0 : index
    %c0_26 = arith.constant 0 : index
    %41 = vector.load %arg4[%c0_23, %c1_24, %c0_25, %c0_26] : memref<1x5x8x128xf32, #tpu.memory_space<vmem>>, vector<1x1x8x128xf32>
    %42 = vector.shape_cast %41 : vector<1x1x8x128xf32> to vector<8x128xf32>
    %43 = vector.shape_cast %40 : vector<8x128xf32> to vector<1x1x8x128xf32>
    tpu.vector_store %arg4[%c0_23, %c1_24, %c0_25, %c0_26], %43 {strides = array<i32>} : memref<1x5x8x128xf32, #tpu.memory_space<vmem>>, vector<1x1x8x128xf32>,
    %c0_27 = arith.constant 0 : index
    %c2 = arith.constant 2 : index
    %c0_28 = arith.constant 0 : index
    %c0_29 = arith.constant 0 : index
    %44 = vector.load %arg4[%c0_27, %c2, %c0_28, %c0_29] : memref<1x5x8x128xf32, #tpu.memory_space<vmem>>, vector<1x1x8x128xf32>
    %45 = vector.shape_cast %44 : vector<1x1x8x128xf32> to vector<8x128xf32>
    %46 = arith.addf %45, %23 : vector<8x128xf32>
    %c0_30 = arith.constant 0 : index
    %c2_31 = arith.constant 2 : index
    %c0_32 = arith.constant 0 : index
    %c0_33 = arith.constant 0 : index
    %47 = vector.load %arg4[%c0_30, %c2_31, %c0_32, %c0_33] : memref<1x5x8x128xf32, #tpu.memory_space<vmem>>, vector<1x1x8x128xf32>
    %48 = vector.shape_cast %47 : vector<1x1x8x128xf32> to vector<8x128xf32>
    %49 = vector.shape_cast %46 : vector<8x128xf32> to vector<1x1x8x128xf32>
    tpu.vector_store %arg4[%c0_30, %c2_31, %c0_32, %c0_33], %49 {strides = array<i32>} : memref<1x5x8x128xf32, #tpu.memory_space<vmem>>, vector<1x1x8x128xf32>,
    %c0_34 = arith.constant 0 : index
    %c3 = arith.constant 3 : index
    %c0_35 = arith.constant 0 : index
    %c0_36 = arith.constant 0 : index
    %50 = vector.load %arg4[%c0_34, %c3, %c0_35, %c0_36] : memref<1x5x8x128xf32, #tpu.memory_space<vmem>>, vector<1x1x8x128xf32>
    %51 = vector.shape_cast %50 : vector<1x1x8x128xf32> to vector<8x128xf32>
    %52 = arith.addf %51, %27 : vector<8x128xf32>
    %c0_37 = arith.constant 0 : index
    %c3_38 = arith.constant 3 : index
    %c0_39 = arith.constant 0 : index
    %c0_40 = arith.constant 0 : index
    %53 = vector.load %arg4[%c0_37, %c3_38, %c0_39, %c0_40] : memref<1x5x8x128xf32, #tpu.memory_space<vmem>>, vector<1x1x8x128xf32>
    %54 = vector.shape_cast %53 : vector<1x1x8x128xf32> to vector<8x128xf32>
    %55 = vector.shape_cast %52 : vector<8x128xf32> to vector<1x1x8x128xf32>
    tpu.vector_store %arg4[%c0_37, %c3_38, %c0_39, %c0_40], %55 {strides = array<i32>} : memref<1x5x8x128xf32, #tpu.memory_space<vmem>>, vector<1x1x8x128xf32>,
    %c0_41 = arith.constant 0 : index
    %c4 = arith.constant 4 : index
    %c0_42 = arith.constant 0 : index
    %c0_43 = arith.constant 0 : index
    %56 = vector.load %arg4[%c0_41, %c4, %c0_42, %c0_43] : memref<1x5x8x128xf32, #tpu.memory_space<vmem>>, vector<1x1x8x128xf32>
    %57 = vector.shape_cast %56 : vector<1x1x8x128xf32> to vector<8x128xf32>
    %58 = arith.addf %57, %31 : vector<8x128xf32>
    %c0_44 = arith.constant 0 : index
    %c4_45 = arith.constant 4 : index
    %c0_46 = arith.constant 0 : index
    %c0_47 = arith.constant 0 : index
    %59 = vector.load %arg4[%c0_44, %c4_45, %c0_46, %c0_47] : memref<1x5x8x128xf32, #tpu.memory_space<vmem>>, vector<1x1x8x128xf32>
    %60 = vector.shape_cast %59 : vector<1x1x8x128xf32> to vector<8x128xf32>
    %61 = vector.shape_cast %58 : vector<8x128xf32> to vector<1x1x8x128xf32>
    tpu.vector_store %arg4[%c0_44, %c4_45, %c0_46, %c0_47], %61 {strides = array<i32>} : memref<1x5x8x128xf32, #tpu.memory_space<vmem>>, vector<1x1x8x128xf32>,
    return
  }
  func.func @transform_0(%arg0: i32, %arg1: i32) -> (i32, i32) {
    %c1_i32 = arith.constant 1 : i32
    %0 = arith.muli %arg0, %c1_i32 : i32
    %1 = arith.addi %0, %arg1 : i32
    %c0_i32 = arith.constant 0 : i32
    %2 = arith.minsi %1, %c0_i32 : i32
    %c0_i32_0 = arith.constant 0 : i32
    %c0_i32_1 = arith.constant 0 : i32
    return %2, %c0_i32_0 : i32, i32
  }
  func.func @transform_1(%arg0: i32, %arg1: i32) -> (i32, i32) {
    %c1_i32 = arith.constant 1 : i32
    %0 = arith.muli %arg0, %c1_i32 : i32
    %1 = arith.addi %0, %arg1 : i32
    %c0_i32 = arith.constant 0 : i32
    %2 = arith.minsi %1, %c0_i32 : i32
    %c0_i32_0 = arith.constant 0 : i32
    %c0_i32_1 = arith.constant 0 : i32
    return %2, %c0_i32_0 : i32, i32
  }
  func.func @transform_2(%arg0: i32, %arg1: i32) -> (i32, i32, i32, i32) {
    %c0_i32 = arith.constant 0 : i32
    %c0_i32_0 = arith.constant 0 : i32
    %c0_i32_1 = arith.constant 0 : i32
    %c0_i32_2 = arith.constant 0 : i32
    return %arg0, %c0_i32, %c0_i32_0, %c0_i32_1 : i32, i32, i32, i32
  }
}

</mosaic_0001>

<llo_original>
// kernel: tpu_custom_call.1
$region0: #{tpu_custom_call.1}
  #allocation0 [shape = 'u32[]', space=smem, size = 0x4, offset = 0x4, fixed_abs, tag = 'smem constant byte address 0x4 - core index']
  #allocation1 [shape = 'u32[144,128]{1,0:T(1,128)}', space=vmem, size = 0x12000, scoped, tag = 'internal scratch']
  %s0 = inlined_call_operand.hbm [shape: f32[16,128], index: 0, kind: input, shape index: {}]
  %s1 = inlined_call_operand.hbm [shape: f32[16,128], index: 1, kind: input, shape index: {}]
  %s2 = inlined_call_operand.hbm [shape: f32[1,5,8,128], index: 2, kind: output, shape index: {}]
  %s3 = sld [smem:[#allocation0]]
  $region30: #{tpu_custom_call.1} parent=0
    _
  %s5 = ssub.s32 1, %s3
  %s6 = scalar_select 0, %s5, %s3
  $region1: #{tpu_custom_call.1} parent=0
    #allocation2 [shape = 'u8[8192]{0}', space=vmem, size = 0x2000, scoped, tag = 'input window, operand 0, single buffered']
    #allocation3 [shape = 's32[1]{0}', space=sflag, size = 0x4, scoped, tag = 'scoped memory for tpu_custom_call.1']
    #allocation4 [shape = 's32[1]{0}', space=sflag, size = 0x4, scoped, tag = 'scoped memory for tpu_custom_call.1']
    #allocation5 [shape = 'u8[8192]{0}', space=vmem, size = 0x2000, scoped, tag = 'input window, operand 1, single buffered']
    #allocation6 [shape = 's32[1]{0}', space=sflag, size = 0x4, scoped, tag = 'scoped memory for tpu_custom_call.1']
    #allocation7 [shape = 'u8[20480]{0}', space=vmem, size = 0x5000, scoped, tag = 'output window, operand 0, single buffered']
    %7 = vsyncpa [#allocation3], 0
    %8 = vsyncpa [#allocation6], 0
    %9 = vsyncpa [#allocation4], 0
    // Predicated region
    $region2: #{tpu_custom_call.1} parent=1 // pred_check
      _
    $region3: #{tpu_custom_call.1} parent=1 // pred_check_branch
      %11 = sbr.rel (0) target = $region5
    $region4: #{tpu_custom_call.1} parent=1 // pred_region
      %s12 = sadd.s32 0, 0
      %p13 = scmp.lt.s32.totalorder %s12, 0
      %s14 = scalar_select %p13, %s12, 0
      %s15 = smul.u32 2, %s14
      %s17 = ssub.s32 256, 256
      %18 = vsyncadd [#allocation3], %s17
      %s19 = smul.addr %s15, 128
      %s20 = scalar_lea.hbm %s0, %s19
      %s21 = sshll.u32 [#allocation2], 4
      %s22 = int_to_ptr.vmem [resolvable:$true] %s21
      %27 = dma.hbm_to_vmem [thread:$0]  %s20, 256, %s22, [#allocation3], 128, 128, 8
    $region5: #{tpu_custom_call.1} parent=1 // pred_fallthru
      _
    // Predicated region
    $region6: #{tpu_custom_call.1} parent=1 // pred_check
      _
    $region7: #{tpu_custom_call.1} parent=1 // pred_check_branch
      %29 = sbr.rel (0) target = $region9
    $region8: #{tpu_custom_call.1} parent=1 // pred_region
      %s30 = sadd.s32 0, 0
      %p31 = scmp.lt.s32.totalorder %s30, 0
      %s32 = scalar_select %p31, %s30, 0
      %s33 = smul.u32 2, %s32
      %s35 = ssub.s32 256, 256
      %36 = vsyncadd [#allocation6], %s35
      %s37 = smul.addr %s33, 128
      %s38 = scalar_lea.hbm %s1, %s37
      %s39 = sshll.u32 [#allocation5], 4
      %s40 = int_to_ptr.vmem [resolvable:$true] %s39
      %45 = dma.hbm_to_vmem [thread:$0]  %s38, 256, %s40, [#allocation6], 128, 128, 8
    $region9: #{tpu_custom_call.1} parent=1 // pred_fallthru
      _
    // Predicated region
    $region10: #{tpu_custom_call.1} parent=1 // pred_check
      _
    $region11: #{tpu_custom_call.1} parent=1 // pred_check_branch
      %47 = sbr.rel (0) target = $region13
    $region12: #{tpu_custom_call.1} parent=1 // pred_region
      %48 = dma.done [#allocation3], 256
    $region13: #{tpu_custom_call.1} parent=1 // pred_fallthru
      _
    // Predicated region
    $region14: #{tpu_custom_call.1} parent=1 // pred_check
      _
    $region15: #{tpu_custom_call.1} parent=1 // pred_check_branch
      %50 = sbr.rel (0) target = $region17
    $region16: #{tpu_custom_call.1} parent=1 // pred_region
      %51 = dma.done [#allocation6], 256
    $region17: #{tpu_custom_call.1} parent=1 // pred_fallthru
      _
    %s52 = sadd.s32 0, 0
    %p53 = scmp.lt.s32.totalorder %s52, 0
    %s54 = scalar_select %p53, %s52, 0
    %s55 = smul.u32 2, %s54
    %s56 = sadd.s32 0, 0
    %p57 = scmp.lt.s32.totalorder %s56, 0
    %s58 = scalar_select %p57, %s56, 0
    %s59 = smul.u32 2, %s58
    %p60 = scmp.eq.s32.totalorder 0, 0
    // Predicated region
    $region18: #{tpu_custom_call.1} parent=1 // pred_check
      %p61 = pneg %p60
    $region19: #{tpu_custom_call.1} parent=1 // pred_check_branch
      %63 = sbr.rel (%p61) target = $region21
    $region20: #{tpu_custom_call.1} parent=1 // pred_region
      %64 = vst [vmem:[#allocation7] sm:$0xff] 0.0
      %65 = vst [vmem:[#allocation7 + $0x8] sm:$0xff] 0.0
      %66 = vst [vmem:[#allocation7 + $0x10] sm:$0xff] 0.0
      %67 = vst [vmem:[#allocation7 + $0x18] sm:$0xff] 0.0
      %68 = vst [vmem:[#allocation7 + $0x20] sm:$0xff] 0.0
    $region21: #{tpu_custom_call.1} parent=1 // pred_fallthru
      _
    %v69 = vld [vmem:[#allocation2] sm:$0xff]
    %v70 = vld [vmem:[#allocation2 + $0x8] sm:$0xff]
    %v71 = vld [vmem:[#allocation5] sm:$0xff]
    %v72 = vld [vmem:[#allocation5 + $0x8] sm:$0xff]
    %v73 = vadd.f32 %v69, %v70
    %v74 = vadd.f32 %v73, 0.0
    %v75 = vadd.f32 %v71, %v72
    %v76 = vadd.f32 %v75, 0.0
    %v77 = vmul.f32 %v69, %v71
    %v78 = vmul.f32 %v70, %v72
    %v79 = vadd.f32 %v77, %v78
    %v80 = vadd.f32 %v79, 0.0
    %v81 = vmul.f32 %v69, %v69
    %v82 = vmul.f32 %v70, %v70
    %v83 = vadd.f32 %v81, %v82
    %v84 = vadd.f32 %v83, 0.0
    %v85 = vmul.f32 %v71, %v71
    %v86 = vmul.f32 %v72, %v72
    %v87 = vadd.f32 %v85, %v86
    %v88 = vadd.f32 %v87, 0.0
    %v89 = vld [vmem:[#allocation7] sm:$0xff]
    %v90 = vadd.f32 %v89, %v74
    %91 = vst [vmem:[#allocation7] sm:$0xff] %v90
    %s92 = scalar_lea.vmem [#allocation7], 8
    %v93 = vld [vmem:[%s92] sm:$0xff]
    %v94 = vadd.f32 %v93, %v76
    %95 = vst [vmem:[%s92] sm:$0xff] %v94
    %s96 = scalar_lea.vmem [#allocation7], 16
    %v97 = vld [vmem:[%s96] sm:$0xff]
    %v98 = vadd.f32 %v97, %v80
    %99 = vst [vmem:[%s96] sm:$0xff] %v98
    %s100 = scalar_lea.vmem [#allocation7], 24
    %v101 = vld [vmem:[%s100] sm:$0xff]
    %v102 = vadd.f32 %v101, %v84
    %103 = vst [vmem:[%s100] sm:$0xff] %v102
    %s104 = scalar_lea.vmem [#allocation7], 32
    %v105 = vld [vmem:[%s104] sm:$0xff]
    %v106 = vadd.f32 %v105, %v88
    %107 = vst [vmem:[%s104] sm:$0xff] %v106
    // Predicated region
    $region22: #{tpu_custom_call.1} parent=1 // pred_check
      _
    $region23: #{tpu_custom_call.1} parent=1 // pred_check_branch
      %109 = sbr.rel (0) target = $region25
    $region24: #{tpu_custom_call.1} parent=1 // pred_region
      %s111 = ssub.s32 640, 640
      %112 = vsyncadd [#allocation4], %s111
      %s113 = sshll.u32 [#allocation7], 4
      %s114 = int_to_ptr.vmem [resolvable:$true] %s113
      %119 = dma.vmem_to_hbm [thread:$0]  %s114, 640, %s2, [#allocation4], 128, 128, 8
    $region25: #{tpu_custom_call.1} parent=1 // pred_fallthru
      _
    // Predicated region
    $region26: #{tpu_custom_call.1} parent=1 // pred_check
      _
    $region27: #{tpu_custom_call.1} parent=1 // pred_check_branch
      %121 = sbr.rel (0) target = $region29
    $region28: #{tpu_custom_call.1} parent=1 // pred_region
      %122 = dma.done [#allocation4], 640
    $region29: #{tpu_custom_call.1} parent=1 // pred_fallthru
      _
    %123 = vsyncpa [#allocation3], 1
    %124 = vsyncpa [#allocation6], 1
    %125 = vsyncpa [#allocation4], 1

</llo_original>
